<compile_context>
chip_gen: v7x
topology: tpu7x:2x2x1
jax: 0.10.0
libtpu: 0.0.40
codegen_flags: <defaults>
</compile_context>

<pallas_src>
import math
import functools

import jax
import jax.numpy as jnp
from jax.experimental import pallas as pl
from jax.experimental.pallas import tpu as pltpu


def _round_up(n, m):
    return ((n + m - 1) // m) * m


def _leaky_relu(x, slope=0.2):
    return jnp.where(x > 0, x, slope * x)


def predictor_kernel(enc_ref, qin_ref, wqkv_ref, bqkv_ref, wfc_ref, bfc_ref,
                     out_ref, *, LP, scale):
    f32 = jnp.float32
    wdt = wfc_ref.dtype

    enc = enc_ref[...]                                   # (TB, S, E) streamed tile
    TB, S, E = enc.shape

    # ---- q / k / v projections: batched MXU matmuls with f32 accumulation.
    #      Each projection occupies its own LP-lane slot of wqkv (zero-padded),
    #      so all slices below are whole-vreg lane-aligned. ----
    q = jnp.dot(qin_ref[...], wqkv_ref[:, 0:LP],
                preferred_element_type=f32) + bqkv_ref[:, 0:LP]           # (TB, LP)

    enc_flat = enc.reshape(TB * S, E)
    k = (jnp.dot(enc_flat, wqkv_ref[:, LP:2 * LP],
                 preferred_element_type=f32).reshape(TB, S, LP)
         + bqkv_ref[:, LP:2 * LP])                                        # (TB, S, LP)
    v = (jnp.dot(enc_flat, wqkv_ref[:, 2 * LP:3 * LP],
                 preferred_element_type=f32).reshape(TB, S, LP)
         + bqkv_ref[:, 2 * LP:3 * LP])                                    # (TB, S, LP)

    # ---- single-head attention, query length 1 (VPU multiply + reduce;
    #      padded lanes of q/k/v are zero, so they contribute nothing). ----
    s = jnp.sum(q[:, None, :] * k, axis=-1) * scale                       # (TB, S)
    m = jnp.max(s, axis=-1, keepdims=True)
    p = jnp.exp(s - m)
    probs = p * pl.reciprocal(jnp.sum(p, axis=-1, keepdims=True), approx=True)
    ctx = jnp.sum(probs[:, :, None] * v, axis=1)                          # (TB, LP)

    # ---- out-proj + fc head: wfc = [Wo | W1 | W2 | W3 | W4], each (LP, LP)
    #      zero-padded; activations cast to weight dtype for native MXU rate,
    #      accumulation and elementwise math stay f32. Dropouts: no-ops. ----
    attn = jnp.dot(ctx.astype(wdt), wfc_ref[:, 0:LP],
                   preferred_element_type=f32) + bfc_ref[:, 0:LP]
    h = _leaky_relu(jnp.dot(attn.astype(wdt), wfc_ref[:, LP:2 * LP],
                            preferred_element_type=f32) + bfc_ref[:, LP:2 * LP])
    h = _leaky_relu(jnp.dot(h.astype(wdt), wfc_ref[:, 2 * LP:3 * LP],
                            preferred_element_type=f32) + bfc_ref[:, 2 * LP:3 * LP])
    h = _leaky_relu(jnp.dot(h.astype(wdt), wfc_ref[:, 3 * LP:4 * LP],
                            preferred_element_type=f32) + bfc_ref[:, 3 * LP:4 * LP])
    y = jnp.tanh(jnp.dot(h.astype(wdt), wfc_ref[:, 4 * LP:5 * LP],
                         preferred_element_type=f32) + bfc_ref[:, 4 * LP:5 * LP])

    out_ref[...] = y.astype(out_ref.dtype)                                # (TB, LP) lane-dense


def make_params(encoding_size, hidden_size, output_size, key):
    E, H, O = encoding_size, hidden_size, output_size
    ks = jax.random.split(key, 16)

    def init(k, shape):
        return jax.random.normal(k, shape, jnp.float32) * 0.1

    return {
        # nn.MultiheadAttention: in_proj (3E, E) split into q/k/v, out_proj (E, E)
        "wq": init(ks[0], (E, E)), "wk": init(ks[1], (E, E)), "wv": init(ks[2], (E, E)),
        "bq": init(ks[3], (E,)),   "bk": init(ks[4], (E,)),   "bv": init(ks[5], (E,)),
        "wo": init(ks[6], (E, E)), "bo": init(ks[7], (E,)),
        # fc_layers
        "w1": init(ks[8],  (H, E)),           "b1": init(ks[9],  (H,)),
        "w2": init(ks[10], (H // 2, H)),      "b2": init(ks[11], (H // 2,)),
        "w3": init(ks[12], (H // 4, H // 2)), "b3": init(ks[13], (H // 4,)),
        "w4": init(ks[14], (O, H // 4)),      "b4": init(ks[15], (O,)),
    }


def predictor_forward(encoded, params, *, block_b=512,
                      compute_dtype=jnp.bfloat16, min_grid_steps=1):
    """Eval-mode Predictor.forward.  Returns (B, 1, O) float32.

    compute_dtype: streaming dtype of the encoded tile / weights (bf16 default);
                   accumulation is always f32.
    min_grid_steps: set to 2 on v7x so the parallel batch axis shards across
                    both TensorCores (only kicks in once B >= 16).
    """
    B, S, E = encoded.shape
    H = params["w1"].shape[0]
    O = params["w4"].shape[0]
    f32 = jnp.float32
    cdt = compute_dtype
    scale = 1.0 / math.sqrt(E)

    # Common lane-padded width for every feature dimension (vreg-dense slices).
    LP = _round_up(max(E, H, H // 2, H // 4, O), 128)

    def pad_cols(w):          # (r, c) -> (r, LP)
        return jnp.pad(w, ((0, 0), (0, LP - w.shape[1])))

    def pad_rows_cols(w):     # (r, c) -> (LP, LP)
        return jnp.pad(w, ((0, LP - w.shape[0]), (0, LP - w.shape[1])))

    def pad_vec(b):           # (n,) -> (LP,)
        return jnp.pad(b, (0, LP - b.shape[0]))

    # --- host-side packing: pre-transpose Linear weights to (in, out), give
    #     each projection / layer its own LP-lane slot, biases stay f32. ---
    wqkv = jnp.concatenate(
        [pad_cols(params["wq"].T), pad_cols(params["wk"].T), pad_cols(params["wv"].T)],
        axis=1).astype(cdt)                                              # (E, 3*LP)
    bqkv = jnp.concatenate(
        [pad_vec(params["bq"]), pad_vec(params["bk"]), pad_vec(params["bv"])]
    ).astype(f32).reshape(1, 3 * LP)

    wfc = jnp.concatenate(
        [pad_rows_cols(params["wo"].T), pad_rows_cols(params["w1"].T),
         pad_rows_cols(params["w2"].T), pad_rows_cols(params["w3"].T),
         pad_rows_cols(params["w4"].T)], axis=1).astype(cdt)             # (LP, 5*LP)
    bfc = jnp.concatenate(
        [pad_vec(params["bo"]), pad_vec(params["b1"]), pad_vec(params["b2"]),
         pad_vec(params["b3"]), pad_vec(params["b4"])]
    ).astype(f32).reshape(1, 5 * LP)

    # --- batch tiling: TB rows per grid step; optionally force >=2 steps for
    #     v7x megacore sharding of the "parallel" axis. ---
    eff_block = block_b
    if min_grid_steps > 1 and B >= 8 * min_grid_steps:
        eff_block = min(eff_block, _round_up(pl.cdiv(B, min_grid_steps), 8))
    if B <= eff_block:
        TB, nb, Bp = B, 1, B
    else:
        TB = max(8, (eff_block // 8) * 8)
        nb = pl.cdiv(B, TB)
        Bp = nb * TB

    x = encoded.astype(cdt)
    if Bp != B:
        x = jnp.pad(x, ((0, Bp - B), (0, 0), (0, 0)))
    x_last = x[:, S - 1, :]                         # pre-sliced query rows (Bp, E)

    # --- explicit VMEM budget: double-buffered streamed tiles + resident
    #     weights + output + headroom for k/v/broadcast intermediates; capped
    #     at 64 MiB so the same setting is valid on v7x. ---
    esz = jnp.dtype(cdt).itemsize
    tile_b = TB * S * E * esz + TB * E * esz
    wgt_b = wqkv.size * esz + wfc.size * esz + (bqkv.size + bfc.size) * 4
    out_b = TB * LP * 4
    interm_b = 4 * TB * S * LP * 4
    vmem_limit = int(min(64 << 20,
                         max(32 << 20, 2 * (tile_b + out_b) + 2 * wgt_b + interm_b)))

    kernel = functools.partial(predictor_kernel, LP=LP, scale=scale)

    # TODO(synk): on v7x, if VMEM gets tight at large TB, put the constant-index
    # weight specs on pipeline_mode=pl.Buffered(1) (they never change per step).
    out = pl.pallas_call(
        kernel,
        out_shape=jax.ShapeDtypeStruct((Bp, LP), f32),
        grid_spec=pltpu.PrefetchScalarGridSpec(
            num_scalar_prefetch=0,
            grid=(nb,),
            in_specs=[
                pl.BlockSpec((TB, S, E), lambda b: (b, 0, 0)),   # streamed encoded tile
                pl.BlockSpec((TB, E), lambda b: (b, 0)),         # last-timestep rows
                pl.BlockSpec(wqkv.shape, lambda b: (0, 0)),      # resident fused q|k|v
                pl.BlockSpec(bqkv.shape, lambda b: (0, 0)),
                pl.BlockSpec(wfc.shape, lambda b: (0, 0)),       # resident Wo|W1..W4
                pl.BlockSpec(bfc.shape, lambda b: (0, 0)),
            ],
            out_specs=pl.BlockSpec((TB, LP), lambda b: (b, 0)),
        ),
        compiler_params=pltpu.CompilerParams(
            dimension_semantics=("parallel",),
            vmem_limit_bytes=vmem_limit),
    )(x, x_last, wqkv, bqkv, wfc, bfc)

    return out[:B, :O].reshape(B, 1, O)


def predictor_reference(encoded, params):
    # pure-JAX f32 reference (eval-mode PyTorch semantics)
    E = encoded.shape[-1]
    q_in = encoded[:, -1:, :]
    q = q_in @ params["wq"].T + params["bq"]
    k = encoded @ params["wk"].T + params["bk"]
    v = encoded @ params["wv"].T + params["bv"]
    scores = jnp.einsum("bqe,bke->bqk", q, k) / math.sqrt(E)
    probs = jax.nn.softmax(scores, axis=-1)
    attn = jnp.einsum("bqk,bke->bqe", probs, v)
    attn = attn @ params["wo"].T + params["bo"]

    def lrelu(x):
        return jnp.where(x > 0, x, 0.2 * x)

    h = lrelu(attn @ params["w1"].T + params["b1"])
    h = lrelu(h @ params["w2"].T + params["b2"])
    h = lrelu(h @ params["w3"].T + params["b3"])
    return jnp.tanh(h @ params["w4"].T + params["b4"])


if __name__ == "__main__":
    B, S = 2, 8
    encoding_size, hidden_size, output_size = 32, 32, 4

    key = jax.random.PRNGKey(0)
    k_x, k_p = jax.random.split(key)
    encoded = jax.random.normal(k_x, (B, S, encoding_size), jnp.float32)
    params = make_params(encoding_size, hidden_size, output_size, k_p)

    ref = predictor_reference(encoded, params)

    # f32 streaming path: tight check (approx reciprocal rel err ~2^-12).
    out_f32 = jax.block_until_ready(
        predictor_forward(encoded, params, compute_dtype=jnp.float32))
    assert out_f32.shape == (B, 1, output_size)
    assert jnp.allclose(out_f32, ref, atol=1e-3, rtol=1e-3), \
        float(jnp.max(jnp.abs(out_f32 - ref)))

    # bf16 streaming path (default; halves HBM bytes of the streamed tile):
    # looser tolerance for bf16 input/weight quantization, accumulation is f32.
    out_bf16 = jax.block_until_ready(predictor_forward(encoded, params))
    assert out_bf16.shape == (B, 1, output_size)
    assert jnp.allclose(out_bf16, ref, atol=5e-2, rtol=5e-2), \
        float(jnp.max(jnp.abs(out_bf16 - ref)))

    print("KERNEL_OK")
</pallas_src>

<mosaic_0001>
module attributes {stable_mosaic.version = 11 : i64} {
  func.func @predictor_kernel(%arg0: i32, %arg1: memref<2x8x32xf32, #tpu.memory_space<vmem>>, %arg2: memref<2x32xf32, #tpu.memory_space<vmem>>, %arg3: memref<32x384xf32, #tpu.memory_space<vmem>>, %arg4: memref<1x384xf32, #tpu.memory_space<vmem>>, %arg5: memref<128x640xf32, #tpu.memory_space<vmem>>, %arg6: memref<1x640xf32, #tpu.memory_space<vmem>>, %arg7: memref<2x128xf32, #tpu.memory_space<vmem>>) attributes {dimension_semantics = [#tpu.dimension_semantics<parallel>], iteration_bounds = array<i64: 1>, scalar_prefetch = 0 : i64, scratch_operands = 0 : i64, tpu.core_type = #tpu.core_type<tc>, window_params = [{transform_indices = @transform_0, window_bounds = array<i64: 2, 8, 32>}, {transform_indices = @transform_1, window_bounds = array<i64: 2, 32>}, {pipeline_mode = #tpu.pipeline_mode<synchronous>, transform_indices = @transform_2, window_bounds = array<i64: 32, 384>}, {pipeline_mode = #tpu.pipeline_mode<synchronous>, transform_indices = @transform_3, window_bounds = array<i64: 1, 384>}, {pipeline_mode = #tpu.pipeline_mode<synchronous>, transform_indices = @transform_4, window_bounds = array<i64: 128, 640>}, {pipeline_mode = #tpu.pipeline_mode<synchronous>, transform_indices = @transform_5, window_bounds = array<i64: 1, 640>}, {transform_indices = @transform_6, window_bounds = array<i64: 2, 128>}]} {
    %c0 = arith.constant 0 : index
    %c0_0 = arith.constant 0 : index
    %c0_1 = arith.constant 0 : index
    %0 = vector.load %arg1[%c0, %c0_0, %c0_1] : memref<2x8x32xf32, #tpu.memory_space<vmem>>, vector<2x8x32xf32>
    %c0_2 = arith.constant 0 : index
    %c0_3 = arith.constant 0 : index
    %1 = vector.load %arg2[%c0_2, %c0_3] : memref<2x32xf32, #tpu.memory_space<vmem>>, vector<2x32xf32>
    %c0_4 = arith.constant 0 : index
    %c0_5 = arith.constant 0 : index
    %2 = vector.load %arg3[%c0_4, %c0_5] : memref<32x384xf32, #tpu.memory_space<vmem>>, vector<32x128xf32>
    %cst = arith.constant dense<0.000000e+00> : vector<2x128xf32>
    %3 = tpu.matmul %1, %2, %cst {dimension_numbers = #tpu.dot_dimension_numbers<[1], [0], [0], [1], [0, 0, 1, 1], [], []>} : vector<2x32xf32>, vector<32x128xf32>, vector<2x128xf32> -> vector<2x128xf32>
    %c0_6 = arith.constant 0 : index
    %c0_7 = arith.constant 0 : index
    %4 = vector.load %arg4[%c0_6, %c0_7] : memref<1x384xf32, #tpu.memory_space<vmem>>, vector<1x128xf32>
    %5 = vector.broadcast %4 : vector<1x128xf32> to vector<2x128xf32>
    %6 = arith.addf %3, %5 : vector<2x128xf32>
    %7 = vector.shape_cast %0 : vector<2x8x32xf32> to vector<16x32xf32>
    %c0_8 = arith.constant 0 : index
    %c128 = arith.constant 128 : index
    %8 = vector.load %arg3[%c0_8, %c128] : memref<32x384xf32, #tpu.memory_space<vmem>>, vector<32x128xf32>
    %cst_9 = arith.constant dense<0.000000e+00> : vector<16x128xf32>
    %9 = tpu.matmul %7, %8, %cst_9 {dimension_numbers = #tpu.dot_dimension_numbers<[1], [0], [0], [1], [0, 0, 1, 1], [], []>} : vector<16x32xf32>, vector<32x128xf32>, vector<16x128xf32> -> vector<16x128xf32>
    %10 = vector.shape_cast %9 : vector<16x128xf32> to vector<2x8x128xf32>
    %c0_10 = arith.constant 0 : index
    %c128_11 = arith.constant 128 : index
    %11 = vector.load %arg4[%c0_10, %c128_11] : memref<1x384xf32, #tpu.memory_space<vmem>>, vector<1x128xf32>
    %12 = vector.shape_cast %11 : vector<1x128xf32> to vector<1x1x128xf32>
    %13 = vector.broadcast %12 : vector<1x1x128xf32> to vector<2x8x128xf32>
    %14 = arith.addf %10, %13 : vector<2x8x128xf32>
    %c0_12 = arith.constant 0 : index
    %c256 = arith.constant 256 : index
    %15 = vector.load %arg3[%c0_12, %c256] : memref<32x384xf32, #tpu.memory_space<vmem>>, vector<32x128xf32>
    %cst_13 = arith.constant dense<0.000000e+00> : vector<16x128xf32>
    %16 = tpu.matmul %7, %15, %cst_13 {dimension_numbers = #tpu.dot_dimension_numbers<[1], [0], [0], [1], [0, 0, 1, 1], [], []>} : vector<16x32xf32>, vector<32x128xf32>, vector<16x128xf32> -> vector<16x128xf32>
    %17 = vector.shape_cast %16 : vector<16x128xf32> to vector<2x8x128xf32>
    %c0_14 = arith.constant 0 : index
    %c256_15 = arith.constant 256 : index
    %18 = vector.load %arg4[%c0_14, %c256_15] : memref<1x384xf32, #tpu.memory_space<vmem>>, vector<1x128xf32>
    %19 = vector.shape_cast %18 : vector<1x128xf32> to vector<1x1x128xf32>
    %20 = vector.broadcast %19 : vector<1x1x128xf32> to vector<2x8x128xf32>
    %21 = arith.addf %17, %20 : vector<2x8x128xf32>
    %22 = vector.shape_cast %6 : vector<2x128xf32> to vector<2x1x128xf32>
    %23 = vector.broadcast %22 : vector<2x1x128xf32> to vector<2x8x128xf32>
    %24 = arith.mulf %23, %14 : vector<2x8x128xf32>
    %cst_16 = arith.constant dense<0.000000e+00> : vector<2x8xf32>
    %25 = vector.multi_reduction <add>, %24, %cst_16 [2] : vector<2x8x128xf32> to vector<2x8xf32>
    %cst_17 = arith.constant 0.176776692 : f32
    %26 = vector.broadcast %cst_17 : f32 to vector<2x8xf32>
    %27 = arith.mulf %25, %26 : vector<2x8xf32>
    %cst_18 = arith.constant dense<0xFF800000> : vector<2xf32>
    %28 = vector.multi_reduction <maximumf>, %27, %cst_18 [1] : vector<2x8xf32> to vector<2xf32>
    %29 = vector.shape_cast %28 : vector<2xf32> to vector<2x1xf32>
    %30 = vector.broadcast %29 : vector<2x1xf32> to vector<2x8xf32>
    %31 = arith.subf %27, %30 : vector<2x8xf32>
    %32 = math.exp %31 : vector<2x8xf32>
    %cst_19 = arith.constant dense<0.000000e+00> : vector<2xf32>
    %33 = vector.multi_reduction <add>, %32, %cst_19 [1] : vector<2x8xf32> to vector<2xf32>
    %34 = vector.shape_cast %33 : vector<2xf32> to vector<2x1xf32>
    %35 = tpu.reciprocal %34 {approx = true} : vector<2x1xf32> -> vector<2x1xf32>
    %36 = vector.broadcast %35 : vector<2x1xf32> to vector<2x8xf32>
    %37 = arith.mulf %32, %36 : vector<2x8xf32>
    %38 = vector.shape_cast %37 : vector<2x8xf32> to vector<2x8x1xf32>
    %39 = vector.broadcast %38 : vector<2x8x1xf32> to vector<2x8x128xf32>
    %40 = arith.mulf %39, %21 : vector<2x8x128xf32>
    %cst_20 = arith.constant dense<0.000000e+00> : vector<2x128xf32>
    %41 = vector.multi_reduction <add>, %40, %cst_20 [1] : vector<2x8x128xf32> to vector<2x128xf32>
    %c0_21 = arith.constant 0 : index
    %c0_22 = arith.constant 0 : index
    %42 = vector.load %arg5[%c0_21, %c0_22] : memref<128x640xf32, #tpu.memory_space<vmem>>, vector<128x128xf32>
    %cst_23 = arith.constant dense<0.000000e+00> : vector<2x128xf32>
    %43 = tpu.matmul %41, %42, %cst_23 {dimension_numbers = #tpu.dot_dimension_numbers<[1], [0], [0], [1], [0, 0, 1, 1], [], []>} : vector<2x128xf32>, vector<128x128xf32>, vector<2x128xf32> -> vector<2x128xf32>
    %c0_24 = arith.constant 0 : index
    %c0_25 = arith.constant 0 : index
    %44 = vector.load %arg6[%c0_24, %c0_25] : memref<1x640xf32, #tpu.memory_space<vmem>>, vector<1x128xf32>
    %45 = vector.broadcast %44 : vector<1x128xf32> to vector<2x128xf32>
    %46 = arith.addf %43, %45 : vector<2x128xf32>
    %c0_26 = arith.constant 0 : index
    %c128_27 = arith.constant 128 : index
    %47 = vector.load %arg5[%c0_26, %c128_27] : memref<128x640xf32, #tpu.memory_space<vmem>>, vector<128x128xf32>
    %cst_28 = arith.constant dense<0.000000e+00> : vector<2x128xf32>
    %48 = tpu.matmul %46, %47, %cst_28 {dimension_numbers = #tpu.dot_dimension_numbers<[1], [0], [0], [1], [0, 0, 1, 1], [], []>} : vector<2x128xf32>, vector<128x128xf32>, vector<2x128xf32> -> vector<2x128xf32>
    %c0_29 = arith.constant 0 : index
    %c128_30 = arith.constant 128 : index
    %49 = vector.load %arg6[%c0_29, %c128_30] : memref<1x640xf32, #tpu.memory_space<vmem>>, vector<1x128xf32>
    %50 = vector.broadcast %49 : vector<1x128xf32> to vector<2x128xf32>
    %51 = arith.addf %48, %50 : vector<2x128xf32>
    %cst_31 = arith.constant 0.000000e+00 : f32
    %52 = vector.broadcast %cst_31 : f32 to vector<2x128xf32>
    %53 = arith.cmpf ogt, %51, %52 : vector<2x128xf32>
    %cst_32 = arith.constant 2.000000e-01 : f32
    %54 = vector.broadcast %cst_32 : f32 to vector<2x128xf32>
    %55 = arith.mulf %54, %51 : vector<2x128xf32>
    %56 = arith.select %53, %51, %55 : vector<2x128xi1>, vector<2x128xf32>
    %c0_33 = arith.constant 0 : index
    %c256_34 = arith.constant 256 : index
    %57 = vector.load %arg5[%c0_33, %c256_34] : memref<128x640xf32, #tpu.memory_space<vmem>>, vector<128x128xf32>
    %cst_35 = arith.constant dense<0.000000e+00> : vector<2x128xf32>
    %58 = tpu.matmul %56, %57, %cst_35 {dimension_numbers = #tpu.dot_dimension_numbers<[1], [0], [0], [1], [0, 0, 1, 1], [], []>} : vector<2x128xf32>, vector<128x128xf32>, vector<2x128xf32> -> vector<2x128xf32>
    %c0_36 = arith.constant 0 : index
    %c256_37 = arith.constant 256 : index
    %59 = vector.load %arg6[%c0_36, %c256_37] : memref<1x640xf32, #tpu.memory_space<vmem>>, vector<1x128xf32>
    %60 = vector.broadcast %59 : vector<1x128xf32> to vector<2x128xf32>
    %61 = arith.addf %58, %60 : vector<2x128xf32>
    %cst_38 = arith.constant 0.000000e+00 : f32
    %62 = vector.broadcast %cst_38 : f32 to vector<2x128xf32>
    %63 = arith.cmpf ogt, %61, %62 : vector<2x128xf32>
    %cst_39 = arith.constant 2.000000e-01 : f32
    %64 = vector.broadcast %cst_39 : f32 to vector<2x128xf32>
    %65 = arith.mulf %64, %61 : vector<2x128xf32>
    %66 = arith.select %63, %61, %65 : vector<2x128xi1>, vector<2x128xf32>
    %c0_40 = arith.constant 0 : index
    %c384 = arith.constant 384 : index
    %67 = vector.load %arg5[%c0_40, %c384] : memref<128x640xf32, #tpu.memory_space<vmem>>, vector<128x128xf32>
    %cst_41 = arith.constant dense<0.000000e+00> : vector<2x128xf32>
    %68 = tpu.matmul %66, %67, %cst_41 {dimension_numbers = #tpu.dot_dimension_numbers<[1], [0], [0], [1], [0, 0, 1, 1], [], []>} : vector<2x128xf32>, vector<128x128xf32>, vector<2x128xf32> -> vector<2x128xf32>
    %c0_42 = arith.constant 0 : index
    %c384_43 = arith.constant 384 : index
    %69 = vector.load %arg6[%c0_42, %c384_43] : memref<1x640xf32, #tpu.memory_space<vmem>>, vector<1x128xf32>
    %70 = vector.broadcast %69 : vector<1x128xf32> to vector<2x128xf32>
    %71 = arith.addf %68, %70 : vector<2x128xf32>
    %cst_44 = arith.constant 0.000000e+00 : f32
    %72 = vector.broadcast %cst_44 : f32 to vector<2x128xf32>
    %73 = arith.cmpf ogt, %71, %72 : vector<2x128xf32>
    %cst_45 = arith.constant 2.000000e-01 : f32
    %74 = vector.broadcast %cst_45 : f32 to vector<2x128xf32>
    %75 = arith.mulf %74, %71 : vector<2x128xf32>
    %76 = arith.select %73, %71, %75 : vector<2x128xi1>, vector<2x128xf32>
    %c0_46 = arith.constant 0 : index
    %c512 = arith.constant 512 : index
    %77 = vector.load %arg5[%c0_46, %c512] : memref<128x640xf32, #tpu.memory_space<vmem>>, vector<128x128xf32>
    %cst_47 = arith.constant dense<0.000000e+00> : vector<2x128xf32>
    %78 = tpu.matmul %76, %77, %cst_47 {dimension_numbers = #tpu.dot_dimension_numbers<[1], [0], [0], [1], [0, 0, 1, 1], [], []>} : vector<2x128xf32>, vector<128x128xf32>, vector<2x128xf32> -> vector<2x128xf32>
    %c0_48 = arith.constant 0 : index
    %c512_49 = arith.constant 512 : index
    %79 = vector.load %arg6[%c0_48, %c512_49] : memref<1x640xf32, #tpu.memory_space<vmem>>, vector<1x128xf32>
    %80 = vector.broadcast %79 : vector<1x128xf32> to vector<2x128xf32>
    %81 = arith.addf %78, %80 : vector<2x128xf32>
    %82 = math.tanh %81 : vector<2x128xf32>
    %c0_50 = arith.constant 0 : index
    %c0_51 = arith.constant 0 : index
    %83 = vector.load %arg7[%c0_50, %c0_51] : memref<2x128xf32, #tpu.memory_space<vmem>>, vector<2x128xf32>
    tpu.vector_store %arg7[%c0_50, %c0_51], %82 {strides = array<i32>} : memref<2x128xf32, #tpu.memory_space<vmem>>, vector<2x128xf32>,
    return
  }
  func.func @transform_0(%arg0: i32) -> (i32, i32, i32) {
    %c0_i32 = arith.constant 0 : i32
    %c0_i32_0 = arith.constant 0 : i32
    %c0_i32_1 = arith.constant 0 : i32
    return %arg0, %c0_i32, %c0_i32_0 : i32, i32, i32
  }
  func.func @transform_1(%arg0: i32) -> (i32, i32) {
    %c0_i32 = arith.constant 0 : i32
    %c0_i32_0 = arith.constant 0 : i32
    return %arg0, %c0_i32 : i32, i32
  }
  func.func @transform_2(%arg0: i32) -> (i32, i32) {
    %c0_i32 = arith.constant 0 : i32
    %c0_i32_0 = arith.constant 0 : i32
    %c0_i32_1 = arith.constant 0 : i32
    return %c0_i32, %c0_i32_0 : i32, i32
  }
  func.func @transform_3(%arg0: i32) -> (i32, i32) {
    %c0_i32 = arith.constant 0 : i32
    %c0_i32_0 = arith.constant 0 : i32
    %c0_i32_1 = arith.constant 0 : i32
    return %c0_i32, %c0_i32_0 : i32, i32
  }
  func.func @transform_4(%arg0: i32) -> (i32, i32) {
    %c0_i32 = arith.constant 0 : i32
    %c0_i32_0 = arith.constant 0 : i32
    %c0_i32_1 = arith.constant 0 : i32
    return %c0_i32, %c0_i32_0 : i32, i32
  }
  func.func @transform_5(%arg0: i32) -> (i32, i32) {
    %c0_i32 = arith.constant 0 : i32
    %c0_i32_0 = arith.constant 0 : i32
    %c0_i32_1 = arith.constant 0 : i32
    return %c0_i32, %c0_i32_0 : i32, i32
  }
  func.func @transform_6(%arg0: i32) -> (i32, i32) {
    %c0_i32 = arith.constant 0 : i32
    %c0_i32_0 = arith.constant 0 : i32
    return %arg0, %c0_i32 : i32, i32
  }
}

</mosaic_0001>

<llo_original>
// kernel: tpu_custom_call.1
$region0: #{tpu_custom_call.1}
  #allocation0 [shape = 'u32[]', space=smem, size = 0x4, offset = 0x4, fixed_abs, tag = 'smem constant byte address 0x4 - core index']
  #allocation1 [shape = 'u32[144,128]{1,0:T(1,128)}', space=vmem, size = 0x12000, scoped, tag = 'internal scratch']
  %s0 = inlined_call_operand.hbm [shape: f32[2,8,32], index: 0, kind: input, shape index: {}]
  %s1 = inlined_call_operand.vmem [shape: f32[2,32], index: 1, kind: input, shape index: {}]
  %s2 = inlined_call_operand.hbm [shape: f32[32,384], index: 2, kind: input, shape index: {}]
  %s3 = inlined_call_operand.vmem [shape: f32[1,384], index: 3, kind: input, shape index: {}]
  %s4 = inlined_call_operand.hbm [shape: f32[128,640], index: 4, kind: input, shape index: {}]
  %s5 = inlined_call_operand.vmem [shape: f32[1,640], index: 5, kind: input, shape index: {}]
  %s6 = inlined_call_operand.hbm [shape: f32[2,128], index: 6, kind: output, shape index: {}]
  %s7 = sld [smem:[#allocation0]]
  $region46: #{tpu_custom_call.1} parent=0
    _
  %s9 = ssub.s32 1, %s7
  %s10 = scalar_select 0, %s9, %s7
  $region1: #{tpu_custom_call.1} parent=0
    #allocation2 [shape = 'u8[8192]{0}', space=vmem, size = 0x2000, scoped, tag = 'input window, operand 0, single buffered']
    #allocation3 [shape = 's32[1]{0}', space=sflag, size = 0x4, scoped, tag = 'scoped memory for tpu_custom_call.1']
    #allocation4 [shape = 's32[1]{0}', space=sflag, size = 0x4, scoped, tag = 'scoped memory for tpu_custom_call.1']
    #allocation5 [shape = 'u8[49152]{0}', space=vmem, size = 0xc000, scoped, tag = 'input window, operand 2, single buffered']
    #allocation6 [shape = 's32[1]{0}', space=sflag, size = 0x4, scoped, tag = 'scoped memory for tpu_custom_call.1']
    #allocation7 [shape = 'u8[327680]{0}', space=vmem, size = 0x50000, scoped, tag = 'input window, operand 4, single buffered']
    #allocation8 [shape = 'u8[1024]{0}', space=vmem, size = 0x400, scoped, tag = 'output window, operand 0, single buffered']
    %11 = vsyncpa [#allocation3], 0
    %12 = vsyncpa [#allocation6], 0
    %13 = vsyncpa [#allocation4], 0
    // Predicated region
    $region2: #{tpu_custom_call.1} parent=1 // pred_check
      _
    $region3: #{tpu_custom_call.1} parent=1 // pred_check_branch
      %15 = sbr.rel (0) target = $region5
    $region4: #{tpu_custom_call.1} parent=1 // pred_region
      %s17 = ssub.s32 256, 256
      %18 = vsyncadd [#allocation3], %s17
      %s19 = sshll.u32 [#allocation2], 4
      %s20 = int_to_ptr.vmem [resolvable:$true] %s19
      %25 = dma.hbm_to_vmem [thread:$0]  %s0, 256, %s20, [#allocation3], 128, 128, 8
    $region5: #{tpu_custom_call.1} parent=1 // pred_fallthru
      _
    // Predicated region
    $region6: #{tpu_custom_call.1} parent=1 // pred_check
      _
    $region7: #{tpu_custom_call.1} parent=1 // pred_check_branch
      %27 = sbr.rel (0) target = $region9
    $region8: #{tpu_custom_call.1} parent=1 // pred_region
      _
    $region9: #{tpu_custom_call.1} parent=1 // pred_fallthru
      _
    // Predicated region
    $region10: #{tpu_custom_call.1} parent=1 // pred_check
      _
    $region11: #{tpu_custom_call.1} parent=1 // pred_check_branch
      %29 = sbr.rel (0) target = $region13
    $region12: #{tpu_custom_call.1} parent=1 // pred_region
      %s31 = ssub.s32 1536, 1536
      %32 = vsyncadd [#allocation6], %s31
      %s33 = sshll.u32 [#allocation5], 4
      %s34 = int_to_ptr.vmem [resolvable:$true] %s33
      %39 = dma.hbm_to_vmem [thread:$0]  %s2, 1536, %s34, [#allocation6], 384, 384, 24
    $region13: #{tpu_custom_call.1} parent=1 // pred_fallthru
      _
    // Predicated region
    $region14: #{tpu_custom_call.1} parent=1 // pred_check
      _
    $region15: #{tpu_custom_call.1} parent=1 // pred_check_branch
      %41 = sbr.rel (0) target = $region17
    $region16: #{tpu_custom_call.1} parent=1 // pred_region
      _
    $region17: #{tpu_custom_call.1} parent=1 // pred_fallthru
      _
    // Predicated region
    $region18: #{tpu_custom_call.1} parent=1 // pred_check
      _
    $region19: #{tpu_custom_call.1} parent=1 // pred_check_branch
      %43 = sbr.rel (0) target = $region21
    $region20: #{tpu_custom_call.1} parent=1 // pred_region
      %s45 = ssub.s32 10240, 10240
      %46 = vsyncadd [#allocation6], %s45
      %s47 = sshll.u32 [#allocation7], 4
      %s48 = int_to_ptr.vmem [resolvable:$true] %s47
      %53 = dma.hbm_to_vmem [thread:$0]  %s4, 10240, %s48, [#allocation6], 640, 640, 40
    $region21: #{tpu_custom_call.1} parent=1 // pred_fallthru
      _
    // Predicated region
    $region22: #{tpu_custom_call.1} parent=1 // pred_check
      _
    $region23: #{tpu_custom_call.1} parent=1 // pred_check_branch
      %55 = sbr.rel (0) target = $region25
    $region24: #{tpu_custom_call.1} parent=1 // pred_region
      _
    $region25: #{tpu_custom_call.1} parent=1 // pred_fallthru
      _
    // Predicated region
    $region26: #{tpu_custom_call.1} parent=1 // pred_check
      _
    $region27: #{tpu_custom_call.1} parent=1 // pred_check_branch
      %57 = sbr.rel (0) target = $region29
    $region28: #{tpu_custom_call.1} parent=1 // pred_region
      %58 = dma.done [#allocation3], 256
    $region29: #{tpu_custom_call.1} parent=1 // pred_fallthru
      _
    // Predicated region
    $region30: #{tpu_custom_call.1} parent=1 // pred_check
      _
    $region31: #{tpu_custom_call.1} parent=1 // pred_check_branch
      %60 = sbr.rel (0) target = $region33
    $region32: #{tpu_custom_call.1} parent=1 // pred_region
      %61 = dma.done [#allocation6], 1536
    $region33: #{tpu_custom_call.1} parent=1 // pred_fallthru
      _
    // Predicated region
    $region34: #{tpu_custom_call.1} parent=1 // pred_check
      _
    $region35: #{tpu_custom_call.1} parent=1 // pred_check_branch
      %63 = sbr.rel (0) target = $region37
    $region36: #{tpu_custom_call.1} parent=1 // pred_region
      %64 = dma.done [#allocation6], 10240
    $region37: #{tpu_custom_call.1} parent=1 // pred_fallthru
      _
    %v65 = vld [vmem:[#allocation2] sm:$0xff]
    %v66 = vld [vmem:[#allocation2 + $0x8] sm:$0xff]
    %v67 = vld [vmem:[%s1] sm:$0x3]
    %v68 = vld [vmem:[#allocation5] sm:$0xff]
    %v69 = vld [vmem:[#allocation5 + $0x18] sm:$0xff]
    %v70 = vld [vmem:[#allocation5 + $0x30] sm:$0xff]
    %v71 = vld [vmem:[#allocation5 + $0x48] sm:$0xff]
    %v72 = vld [vmem:[%s3] sm:$0x1]
    %v74 = vlaneseq
    %v75 = vshrl.u32 %v74, 7
    %v76 = vsub.s32 0, %v75
    %v77 = vrot.slane %v72, %v76
    %vm79 = vcmask 261120
    %v81 = vsel %vm79, %v67, 0
    %83 = vmatprep.subr.mxu0 0.0
    %84 = vmatpush1.msra.mxu0 %v68
    %85 = vmatprep.subr.mxu0 0.0
    %86 = vmatpush1.msra.mxu0 %v69
    %87 = vmatprep.subr.mxu0 0.0
    %88 = vmatpush1.msra.mxu0 %v70
    %89 = vmatprep.subr.mxu0 0.0
    %90 = vmatpush1.msra.mxu0 %v71
    %91 = vmatprep.subr.mxu0 0.0
    %92 = vmatpush1.msra.mxu0 0.0
    %93 = vmatprep.subr.mxu0 0.0
    %94 = vmatpush1.msra.mxu0 0.0
    %95 = vmatprep.subr.mxu0 0.0
    %96 = vmatpush1.msra.mxu0 0.0
    %97 = vmatprep.subr.mxu0 0.0
    %98 = vmatpush1.msra.mxu0 0.0
    %99 = vmatprep.subr.mxu0 0.0
    %100 = vmatpush1.msra.mxu0 0.0
    %101 = vmatprep.subr.mxu0 0.0
    %102 = vmatpush1.msra.mxu0 0.0
    %103 = vmatprep.subr.mxu0 0.0
    %104 = vmatpush1.msra.mxu0 0.0
    %105 = vmatprep.subr.mxu0 0.0
    %106 = vmatpush1.msra.mxu0 0.0
    %107 = vmatprep.subr.mxu0 0.0
    %108 = vmatpush1.msra.mxu0 0.0
    %109 = vmatprep.subr.mxu0 0.0
    %110 = vmatpush1.msra.mxu0 0.0
    %111 = vmatprep.subr.mxu0 0.0
    %112 = vmatpush1.msra.mxu0 0.0
    %113 = vmatprep.subr.mxu0 0.0
    %114 = vmatpush1.msra.mxu0 0.0
    %115 = vmatprep.subr.mxu0 0.0
    %116 = vmatpush1.msra.mxu0 0.0
    %117 = vmatprep.subr.mxu0 0.0
    %118 = vmatpush1.msra.mxu0 0.0
    %119 = vmatprep.subr.mxu0 0.0
    %120 = vmatpush1.msra.mxu0 0.0
    %121 = vmatprep.subr.mxu0 0.0
    %122 = vmatpush1.msra.mxu0 0.0
    %123 = vmatprep.subr.mxu0 0.0
    %124 = vmatpush1.msra.mxu0 0.0
    %125 = vmatprep.subr.mxu0 0.0
    %126 = vmatpush1.msra.mxu0 0.0
    %127 = vmatprep.subr.mxu0 0.0
    %128 = vmatpush1.msra.mxu0 0.0
    %129 = vmatprep.subr.mxu0 0.0
    %130 = vmatpush1.msra.mxu0 0.0
    %131 = vmatprep.subr.mxu0 0.0
    %132 = vmatpush1.msra.mxu0 0.0
    %133 = vmatprep.subr.mxu0 0.0
    %134 = vmatpush1.msra.mxu0 0.0
    %135 = vmatprep.subr.mxu0 0.0
    %136 = vmatpush1.msra.mxu0 0.0
    %137 = vmatprep.subr.mxu0 0.0
    %138 = vmatpush1.msra.mxu0 0.0
    %139 = vmatprep.subr.mxu0 0.0
    %140 = vmatpush1.msra.mxu0 0.0
    %141 = vmatprep.subr.mxu0 0.0
    %142 = vmatpush1.msra.mxu0 0.0
    %143 = vmatprep.subr.mxu0 0.0
    %144 = vmatpush1.msra.mxu0 0.0
    %145 = vmatprep.subr.mxu0 0.0
    %146 = vmatpush1.msra.mxu0 0.0
    %147 = vmatprep.mubr.f32.mxu0 0.0
    %148 = vmatmul.mubr.f32.gmra.mrb[0].mxu0 %v81
    %v149 = vpop.f32.mrb[0].mxu0
    %v150 = vadd.f32 %v77, %v149
    %v151 = vpop.f32.mrb[0].mxu0
    %152 = vdwg.mxu0
    %v153 = vld [vmem:[#allocation5 + $0x8] sm:$0xff]
    %v154 = vld [vmem:[#allocation5 + $0x20] sm:$0xff]
    %v155 = vld [vmem:[#allocation5 + $0x38] sm:$0xff]
    %v156 = vld [vmem:[#allocation5 + $0x50] sm:$0xff]
    %v158 = vsel %vm79, %v65, 0
    %v161 = vsel %vm79, %v66, 0
    %163 = vmatprep.subr.mxu0 0.0
    %164 = vmatpush1.msra.mxu0 %v153
    %165 = vmatprep.subr.mxu0 0.0
    %166 = vmatpush1.msra.mxu0 %v154
    %167 = vmatprep.subr.mxu0 0.0
    %168 = vmatpush1.msra.mxu0 %v155
    %169 = vmatprep.subr.mxu0 0.0
    %170 = vmatpush1.msra.mxu0 %v156
    %171 = vmatprep.subr.mxu0 0.0
    %172 = vmatpush1.msra.mxu0 0.0
    %173 = vmatprep.subr.mxu0 0.0
    %174 = vmatpush1.msra.mxu0 0.0
    %175 = vmatprep.subr.mxu0 0.0
    %176 = vmatpush1.msra.mxu0 0.0
    %177 = vmatprep.subr.mxu0 0.0
    %178 = vmatpush1.msra.mxu0 0.0
    %179 = vmatprep.subr.mxu0 0.0
    %180 = vmatpush1.msra.mxu0 0.0
    %181 = vmatprep.subr.mxu0 0.0
    %182 = vmatpush1.msra.mxu0 0.0
    %183 = vmatprep.subr.mxu0 0.0
    %184 = vmatpush1.msra.mxu0 0.0
    %185 = vmatprep.subr.mxu0 0.0
    %186 = vmatpush1.msra.mxu0 0.0
    %187 = vmatprep.subr.mxu0 0.0
    %188 = vmatpush1.msra.mxu0 0.0
    %189 = vmatprep.subr.mxu0 0.0
    %190 = vmatpush1.msra.mxu0 0.0
    %191 = vmatprep.subr.mxu0 0.0
    %192 = vmatpush1.msra.mxu0 0.0
    %193 = vmatprep.subr.mxu0 0.0
    %194 = vmatpush1.msra.mxu0 0.0
    %195 = vmatprep.subr.mxu0 0.0
    %196 = vmatpush1.msra.mxu0 0.0
    %197 = vmatprep.subr.mxu0 0.0
    %198 = vmatpush1.msra.mxu0 0.0
    %199 = vmatprep.subr.mxu0 0.0
    %200 = vmatpush1.msra.mxu0 0.0
    %201 = vmatprep.subr.mxu0 0.0
    %202 = vmatpush1.msra.mxu0 0.0
    %203 = vmatprep.subr.mxu0 0.0
    %204 = vmatpush1.msra.mxu0 0.0
    %205 = vmatprep.subr.mxu0 0.0
    %206 = vmatpush1.msra.mxu0 0.0
    %207 = vmatprep.subr.mxu0 0.0
    %208 = vmatpush1.msra.mxu0 0.0
    %209 = vmatprep.subr.mxu0 0.0
    %210 = vmatpush1.msra.mxu0 0.0
    %211 = vmatprep.subr.mxu0 0.0
    %212 = vmatpush1.msra.mxu0 0.0
    %213 = vmatprep.subr.mxu0 0.0
    %214 = vmatpush1.msra.mxu0 0.0
    %215 = vmatprep.subr.mxu0 0.0
    %216 = vmatpush1.msra.mxu0 0.0
    %217 = vmatprep.subr.mxu0 0.0
    %218 = vmatpush1.msra.mxu0 0.0
    %219 = vmatprep.subr.mxu0 0.0
    %220 = vmatpush1.msra.mxu0 0.0
    %221 = vmatprep.subr.mxu0 0.0
    %222 = vmatpush1.msra.mxu0 0.0
    %223 = vmatprep.subr.mxu0 0.0
    %224 = vmatpush1.msra.mxu0 0.0
    %225 = vmatprep.subr.mxu0 0.0
    %226 = vmatpush1.msra.mxu0 0.0
    %227 = vmatprep.mubr.f32.mxu0 0.0
    %228 = vmatmul.mubr.f32.gmra.mrb[0].mxu0 %v158
    %v229 = vpop.f32.mrb[0].mxu0
    %v230 = vadd.f32 0.0, %v229
    %v231 = vpop.f32.mrb[0].mxu0
    %232 = vmatprep.mubr.f32.mxu0 0.0
    %233 = vmatmul.mubr.f32.gmra.mrb[0].mxu0 %v161
    %v234 = vpop.f32.mrb[0].mxu0
    %v235 = vadd.f32 0.0, %v234
    %v236 = vpop.f32.mrb[0].mxu0
    %237 = vdwg.mxu0
    %v238 = vld [vmem:[%s3 + $0x1] sm:$0x1]
    %v240 = vlaneseq
    %v241 = vshrl.u32 %v240, 7
    %v242 = vsub.s32 0, %v241
    %v243 = vrot.slane %v238, %v242
    %v245 = vadd.f32 %v230, %v243
    %v246 = vadd.f32 %v235, %v243
    %v247 = vld [vmem:[#allocation5 + $0x10] sm:$0xff]
    %v248 = vld [vmem:[#allocation5 + $0x28] sm:$0xff]
    %v249 = vld [vmem:[#allocation5 + $0x40] sm:$0xff]
    %v250 = vld [vmem:[#allocation5 + $0x58] sm:$0xff]
    %251 = vmatprep.subr.mxu0 0.0
    %252 = vmatpush1.msra.mxu0 %v247
    %253 = vmatprep.subr.mxu0 0.0
    %254 = vmatpush1.msra.mxu0 %v248
    %255 = vmatprep.subr.mxu0 0.0
    %256 = vmatpush1.msra.mxu0 %v249
    %257 = vmatprep.subr.mxu0 0.0
    %258 = vmatpush1.msra.mxu0 %v250
    %259 = vmatprep.subr.mxu0 0.0
    %260 = vmatpush1.msra.mxu0 0.0
    %261 = vmatprep.subr.mxu0 0.0
    %262 = vmatpush1.msra.mxu0 0.0
    %263 = vmatprep.subr.mxu0 0.0
    %264 = vmatpush1.msra.mxu0 0.0
    %265 = vmatprep.subr.mxu0 0.0
    %266 = vmatpush1.msra.mxu0 0.0
    %267 = vmatprep.subr.mxu0 0.0
    %268 = vmatpush1.msra.mxu0 0.0
    %269 = vmatprep.subr.mxu0 0.0
    %270 = vmatpush1.msra.mxu0 0.0
    %271 = vmatprep.subr.mxu0 0.0
    %272 = vmatpush1.msra.mxu0 0.0
    %273 = vmatprep.subr.mxu0 0.0
    %274 = vmatpush1.msra.mxu0 0.0
    %275 = vmatprep.subr.mxu0 0.0
    %276 = vmatpush1.msra.mxu0 0.0
    %277 = vmatprep.subr.mxu0 0.0
    %278 = vmatpush1.msra.mxu0 0.0
    %279 = vmatprep.subr.mxu0 0.0
    %280 = vmatpush1.msra.mxu0 0.0
    %281 = vmatprep.subr.mxu0 0.0
    %282 = vmatpush1.msra.mxu0 0.0
    %283 = vmatprep.subr.mxu0 0.0
    %284 = vmatpush1.msra.mxu0 0.0
    %285 = vmatprep.subr.mxu0 0.0
    %286 = vmatpush1.msra.mxu0 0.0
    %287 = vmatprep.subr.mxu0 0.0
    %288 = vmatpush1.msra.mxu0 0.0
    %289 = vmatprep.subr.mxu0 0.0
    %290 = vmatpush1.msra.mxu0 0.0
    %291 = vmatprep.subr.mxu0 0.0
    %292 = vmatpush1.msra.mxu0 0.0
    %293 = vmatprep.subr.mxu0 0.0
    %294 = vmatpush1.msra.mxu0 0.0
    %295 = vmatprep.subr.mxu0 0.0
    %296 = vmatpush1.msra.mxu0 0.0
    %297 = vmatprep.subr.mxu0 0.0
    %298 = vmatpush1.msra.mxu0 0.0
    %299 = vmatprep.subr.mxu0 0.0
    %300 = vmatpush1.msra.mxu0 0.0
    %301 = vmatprep.subr.mxu0 0.0
    %302 = vmatpush1.msra.mxu0 0.0
    %303 = vmatprep.subr.mxu0 0.0
    %304 = vmatpush1.msra.mxu0 0.0
    %305 = vmatprep.subr.mxu0 0.0
    %306 = vmatpush1.msra.mxu0 0.0
    %307 = vmatprep.subr.mxu0 0.0
    %308 = vmatpush1.msra.mxu0 0.0
    %309 = vmatprep.subr.mxu0 0.0
    %310 = vmatpush1.msra.mxu0 0.0
    %311 = vmatprep.subr.mxu0 0.0
    %312 = vmatpush1.msra.mxu0 0.0
    %313 = vmatprep.subr.mxu0 0.0
    %314 = vmatpush1.msra.mxu0 0.0
    %315 = vmatprep.mubr.f32.mxu0 0.0
    %316 = vmatmul.mubr.f32.gmra.mrb[0].mxu0 %v158
    %v317 = vpop.f32.mrb[0].mxu0
    %v318 = vadd.f32 0.0, %v317
    %v319 = vpop.f32.mrb[0].mxu0
    %320 = vmatprep.mubr.f32.mxu0 0.0
    %321 = vmatmul.mubr.f32.gmra.mrb[0].mxu0 %v161
    %v322 = vpop.f32.mrb[0].mxu0
    %v323 = vadd.f32 0.0, %v322
    %v324 = vpop.f32.mrb[0].mxu0
    %325 = vdwg.mxu0
    %v326 = vld [vmem:[%s3 + $0x2] sm:$0x1]
    %v328 = vlaneseq
    %v329 = vshrl.u32 %v328, 7
    %v330 = vsub.s32 0, %v329
    %v331 = vrot.slane %v326, %v330
    %v333 = vadd.f32 %v318, %v331
    %v334 = vadd.f32 %v323, %v331
    %v337 = vunpack.c.l.s4 1966171168
    %v338 = vunpack.c.0.s8 %v337
    %v339 = vlaneseq
    %v340 = vshrl.u32 %v339, 7
    %v341 = vsub.s32 %v338, %v340
    %v342 = vrot.slane %v150, %v341
    %v343 = vcombine.high %v342, %v342
    %v345 = vunpack.c.l.s4 1966171168
    %v346 = vunpack.c.0.s8 %v345
    %v347 = vlaneseq
    %v348 = vshrl.u32 %v347, 7
    %v349 = vsub.s32 %v346, %v348
    %v350 = vrot.slane %v342, %v349
    %v352 = vunpack.c.l.s4 1966171168
    %v353 = vunpack.c.0.s8 %v352
    %v354 = vlaneseq
    %v355 = vshrl.u32 %v354, 7
    %v356 = vsub.s32 %v353, %v355
    %v357 = vrot.slane %v343, %v356
    %v358 = vlaneseq
    %v359 = vshrl.u32 %v358, 7
    %v360 = vsub.s32 0, %v359
    %v361 = vrot.slane %v350, %v360
    %v362 = vlaneseq
    %v363 = vshrl.u32 %v362, 7
    %v364 = vsub.s32 0, %v363
    %v365 = vrot.slane %v357, %v364
    %v368 = vmul.f32 %v361, %v245
    %v369 = vmul.f32 %v365, %v246
    %370 = vadd.xlane.f32.xlu0 %v368
    %v371 = vpop.xlane.xlu0 %370
    %372 = vadd.xlane.f32.xlu0 %v369
    %v373 = vpop.xlane.xlu0 %372
    %v374 = vmul.f32 %v371, 0.17677669
    %v375 = vmul.f32 %v373, 0.17677669
    %v378 = vlaneseq
    %v379 = vand.u32 %v378, 127
    %v380 = vlaneseq
    %v381 = vshrl.u32 %v380, 7
    %v382 = vsub.s32 %v379, %v381
    %v383 = vrot.slane %v374, %v382
    %v384 = vlaneseq
    %v385 = vshrl.u32 %v384, 7
    %v386 = vsub.s32 %v379, %v385
    %v387 = vrot.slane %v375, %v386
    %vm388 = vcmask 1041409
    %v389 = vsel %vm388, %v387, %v383
    %vm391 = vcmask 58368
    %v392 = vsel %vm391, %v389, -inf
    %393 = vmax.xlane.f32.xlu0 %v392
    %v394 = vpop.xlane.xlu0 %393
    %v396 = vlaneseq
    %v397 = vshrl.u32 %v396, 7
    %v398 = vsub.s32 0, %v397
    %v399 = vrot.slane %v394, %v398
    %v400 = vlaneseq
    %v401 = vshrl.u32 %v400, 7
    %v402 = vsub.s32 1, %v401
    %v403 = vrot.slane %v394, %v402
    %v406 = vsub.f32 %v374, %v399
    %v407 = vsub.f32 %v375, %v403
    %v408 = vmul.f32 %v406, 1.442695
    %v409 = vpow.pop %v408
    %v410 = vmul.f32 %v407, 1.442695
    %v411 = vpow.pop %v410
    %414 = vset.pattern.permute.xlu0 0
    %415 = vperm.xlu0 %414, %v409
    %v416 = vpop.permute.xlu0 %415
    %417 = vset.pattern.permute.xlu0 0
    %418 = vperm.xlu0 %417, %v411
    %v419 = vpop.permute.xlu0 %418
    %v420 = vlaneseq
    %v421 = vshrl.u32 %v420, 7
    %v422 = vsub.s32 %v379, %v421
    %v423 = vrot.slane %v416, %v422
    %v424 = vlaneseq
    %v425 = vshrl.u32 %v424, 7
    %v426 = vsub.s32 %v379, %v425
    %v427 = vrot.slane %v419, %v426
    %v428 = vsel %vm388, %v427, %v423
    %v430 = vsel %vm391, %v428, 0.0
    %431 = vadd.xlane.f32.xlu0 %v430
    %v432 = vpop.xlane.xlu0 %431
    %v433 = vrcp.pop %v432
    %v435 = vlaneseq
    %v436 = vshrl.u32 %v435, 7
    %v437 = vsub.s32 0, %v436
    %v438 = vrot.slane %v433, %v437
    %v439 = vlaneseq
    %v440 = vshrl.u32 %v439, 7
    %v441 = vsub.s32 1, %v440
    %v442 = vrot.slane %v433, %v441
    %v445 = vmul.f32 %v409, %v438
    %v446 = vmul.f32 %v411, %v442
    %448 = vset.pattern.permute.xlu0 0
    %449 = vperm.xlu0 %448, %v445
    %v450 = vpop.permute.xlu0 %449
    %453 = vset.pattern.permute.xlu0 0
    %454 = vperm.xlu0 %453, %v446
    %v455 = vpop.permute.xlu0 %454
    %v457 = vmul.f32 %v450, %v333
    %v458 = vmul.f32 %v455, %v334
    %v459 = vrot.slane %v457, 4
    %v460 = vadd.f32 %v457, %v459
    %v461 = vrot.slane %v460, 2
    %v462 = vadd.f32 %v460, %v461
    %v463 = vrot.slane %v462, 1
    %v464 = vadd.f32 %v462, %v463
    %v465 = vrot.slane %v458, 4
    %v466 = vadd.f32 %v458, %v465
    %v467 = vrot.slane %v466, 2
    %v468 = vadd.f32 %v466, %v467
    %v469 = vrot.slane %v468, 1
    %v470 = vadd.f32 %v468, %v469
    %v471 = vld [vmem:[#allocation7] sm:$0xff]
    %v472 = vld [vmem:[#allocation7 + $0x28] sm:$0xff]
    %v473 = vld [vmem:[#allocation7 + $0x50] sm:$0xff]
    %v474 = vld [vmem:[#allocation7 + $0x78] sm:$0xff]
    %v475 = vld [vmem:[#allocation7 + $0xa0] sm:$0xff]
    %v476 = vld [vmem:[#allocation7 + $0xc8] sm:$0xff]
    %v477 = vld [vmem:[#allocation7 + $0xf0] sm:$0xff]
    %v478 = vld [vmem:[#allocation7 + $0x118] sm:$0xff]
    %v479 = vld [vmem:[#allocation7 + $0x140] sm:$0xff]
    %v480 = vld [vmem:[#allocation7 + $0x168] sm:$0xff]
    %v481 = vld [vmem:[#allocation7 + $0x190] sm:$0xff]
    %v482 = vld [vmem:[#allocation7 + $0x1b8] sm:$0xff]
    %v483 = vld [vmem:[#allocation7 + $0x1e0] sm:$0xff]
    %v484 = vld [vmem:[#allocation7 + $0x208] sm:$0xff]
    %v485 = vld [vmem:[#allocation7 + $0x230] sm:$0xff]
    %v486 = vld [vmem:[#allocation7 + $0x258] sm:$0xff]
    %v487 = vld [vmem:[%s5] sm:$0x1]
    %v489 = vlaneseq
    %v490 = vshrl.u32 %v489, 7
    %v491 = vsub.s32 0, %v490
    %v492 = vrot.slane %v487, %v491
    %v496 = vsel %vm388, %v470, %v464
    %498 = vmatprep.subr.mxu0 0.0
    %499 = vmatpush1.msra.mxu0 %v471
    %500 = vmatprep.subr.mxu0 0.0
    %501 = vmatpush1.msra.mxu0 %v472
    %502 = vmatprep.subr.mxu0 0.0
    %503 = vmatpush1.msra.mxu0 %v473
    %504 = vmatprep.subr.mxu0 0.0
    %505 = vmatpush1.msra.mxu0 %v474
    %506 = vmatprep.subr.mxu0 0.0
    %507 = vmatpush1.msra.mxu0 %v475
    %508 = vmatprep.subr.mxu0 0.0
    %509 = vmatpush1.msra.mxu0 %v476
    %510 = vmatprep.subr.mxu0 0.0
    %511 = vmatpush1.msra.mxu0 %v477
    %512 = vmatprep.subr.mxu0 0.0
    %513 = vmatpush1.msra.mxu0 %v478
    %514 = vmatprep.subr.mxu0 0.0
    %515 = vmatpush1.msra.mxu0 %v479
    %516 = vmatprep.subr.mxu0 0.0
    %517 = vmatpush1.msra.mxu0 %v480
    %518 = vmatprep.subr.mxu0 0.0
    %519 = vmatpush1.msra.mxu0 %v481
    %520 = vmatprep.subr.mxu0 0.0
    %521 = vmatpush1.msra.mxu0 %v482
    %522 = vmatprep.subr.mxu0 0.0
    %523 = vmatpush1.msra.mxu0 %v483
    %524 = vmatprep.subr.mxu0 0.0
    %525 = vmatpush1.msra.mxu0 %v484
    %526 = vmatprep.subr.mxu0 0.0
    %527 = vmatpush1.msra.mxu0 %v485
    %528 = vmatprep.subr.mxu0 0.0
    %529 = vmatpush1.msra.mxu0 %v486
    %530 = vmatprep.subr.mxu0 0.0
    %531 = vmatpush1.msra.mxu0 0.0
    %532 = vmatprep.subr.mxu0 0.0
    %533 = vmatpush1.msra.mxu0 0.0
    %534 = vmatprep.subr.mxu0 0.0
    %535 = vmatpush1.msra.mxu0 0.0
    %536 = vmatprep.subr.mxu0 0.0
    %537 = vmatpush1.msra.mxu0 0.0
    %538 = vmatprep.subr.mxu0 0.0
    %539 = vmatpush1.msra.mxu0 0.0
    %540 = vmatprep.subr.mxu0 0.0
    %541 = vmatpush1.msra.mxu0 0.0
    %542 = vmatprep.subr.mxu0 0.0
    %543 = vmatpush1.msra.mxu0 0.0
    %544 = vmatprep.subr.mxu0 0.0
    %545 = vmatpush1.msra.mxu0 0.0
    %546 = vmatprep.subr.mxu0 0.0
    %547 = vmatpush1.msra.mxu0 0.0
    %548 = vmatprep.subr.mxu0 0.0
    %549 = vmatpush1.msra.mxu0 0.0
    %550 = vmatprep.subr.mxu0 0.0
    %551 = vmatpush1.msra.mxu0 0.0
    %552 = vmatprep.subr.mxu0 0.0
    %553 = vmatpush1.msra.mxu0 0.0
    %554 = vmatprep.subr.mxu0 0.0
    %555 = vmatpush1.msra.mxu0 0.0
    %556 = vmatprep.subr.mxu0 0.0
    %557 = vmatpush1.msra.mxu0 0.0
    %558 = vmatprep.subr.mxu0 0.0
    %559 = vmatpush1.msra.mxu0 0.0
    %560 = vmatprep.subr.mxu0 0.0
    %561 = vmatpush1.msra.mxu0 0.0
    %562 = vmatprep.mubr.f32.mxu0 0.0
    %563 = vmatmul.mubr.f32.gmra.mrb[0].mxu0 %v496
    %v564 = vpop.f32.mrb[0].mxu0
    %v565 = vadd.f32 %v492, %v564
    %v566 = vpop.f32.mrb[0].mxu0
    %567 = vdwg.mxu0
    %v568 = vld [vmem:[#allocation7 + $0x8] sm:$0xff]
    %v569 = vld [vmem:[#allocation7 + $0x30] sm:$0xff]
    %v570 = vld [vmem:[#allocation7 + $0x58] sm:$0xff]
    %v571 = vld [vmem:[#allocation7 + $0x80] sm:$0xff]
    %v572 = vld [vmem:[#allocation7 + $0xa8] sm:$0xff]
    %v573 = vld [vmem:[#allocation7 + $0xd0] sm:$0xff]
    %v574 = vld [vmem:[#allocation7 + $0xf8] sm:$0xff]
    %v575 = vld [vmem:[#allocation7 + $0x120] sm:$0xff]
    %v576 = vld [vmem:[#allocation7 + $0x148] sm:$0xff]
    %v577 = vld [vmem:[#allocation7 + $0x170] sm:$0xff]
    %v578 = vld [vmem:[#allocation7 + $0x198] sm:$0xff]
    %v579 = vld [vmem:[#allocation7 + $0x1c0] sm:$0xff]
    %v580 = vld [vmem:[#allocation7 + $0x1e8] sm:$0xff]
    %v581 = vld [vmem:[#allocation7 + $0x210] sm:$0xff]
    %v582 = vld [vmem:[#allocation7 + $0x238] sm:$0xff]
    %v583 = vld [vmem:[#allocation7 + $0x260] sm:$0xff]
    %v584 = vld [vmem:[%s5 + $0x1] sm:$0x1]
    %v586 = vlaneseq
    %v587 = vshrl.u32 %v586, 7
    %v588 = vsub.s32 0, %v587
    %v589 = vrot.slane %v584, %v588
    %591 = vmatprep.subr.mxu0 0.0
    %592 = vmatpush1.msra.mxu0 %v568
    %593 = vmatprep.subr.mxu0 0.0
    %594 = vmatpush1.msra.mxu0 %v569
    %595 = vmatprep.subr.mxu0 0.0
    %596 = vmatpush1.msra.mxu0 %v570
    %597 = vmatprep.subr.mxu0 0.0
    %598 = vmatpush1.msra.mxu0 %v571
    %599 = vmatprep.subr.mxu0 0.0
    %600 = vmatpush1.msra.mxu0 %v572
    %601 = vmatprep.subr.mxu0 0.0
    %602 = vmatpush1.msra.mxu0 %v573
    %603 = vmatprep.subr.mxu0 0.0
    %604 = vmatpush1.msra.mxu0 %v574
    %605 = vmatprep.subr.mxu0 0.0
    %606 = vmatpush1.msra.mxu0 %v575
    %607 = vmatprep.subr.mxu0 0.0
    %608 = vmatpush1.msra.mxu0 %v576
    %609 = vmatprep.subr.mxu0 0.0
    %610 = vmatpush1.msra.mxu0 %v577
    %611 = vmatprep.subr.mxu0 0.0
    %612 = vmatpush1.msra.mxu0 %v578
    %613 = vmatprep.subr.mxu0 0.0
    %614 = vmatpush1.msra.mxu0 %v579
    %615 = vmatprep.subr.mxu0 0.0
    %616 = vmatpush1.msra.mxu0 %v580
    %617 = vmatprep.subr.mxu0 0.0
    %618 = vmatpush1.msra.mxu0 %v581
    %619 = vmatprep.subr.mxu0 0.0
    %620 = vmatpush1.msra.mxu0 %v582
    %621 = vmatprep.subr.mxu0 0.0
    %622 = vmatpush1.msra.mxu0 %v583
    %623 = vmatprep.subr.mxu0 0.0
    %624 = vmatpush1.msra.mxu0 0.0
    %625 = vmatprep.subr.mxu0 0.0
    %626 = vmatpush1.msra.mxu0 0.0
    %627 = vmatprep.subr.mxu0 0.0
    %628 = vmatpush1.msra.mxu0 0.0
    %629 = vmatprep.subr.mxu0 0.0
    %630 = vmatpush1.msra.mxu0 0.0
    %631 = vmatprep.subr.mxu0 0.0
    %632 = vmatpush1.msra.mxu0 0.0
    %633 = vmatprep.subr.mxu0 0.0
    %634 = vmatpush1.msra.mxu0 0.0
    %635 = vmatprep.subr.mxu0 0.0
    %636 = vmatpush1.msra.mxu0 0.0
    %637 = vmatprep.subr.mxu0 0.0
    %638 = vmatpush1.msra.mxu0 0.0
    %639 = vmatprep.subr.mxu0 0.0
    %640 = vmatpush1.msra.mxu0 0.0
    %641 = vmatprep.subr.mxu0 0.0
    %642 = vmatpush1.msra.mxu0 0.0
    %643 = vmatprep.subr.mxu0 0.0
    %644 = vmatpush1.msra.mxu0 0.0
    %645 = vmatprep.subr.mxu0 0.0
    %646 = vmatpush1.msra.mxu0 0.0
    %647 = vmatprep.subr.mxu0 0.0
    %648 = vmatpush1.msra.mxu0 0.0
    %649 = vmatprep.subr.mxu0 0.0
    %650 = vmatpush1.msra.mxu0 0.0
    %651 = vmatprep.subr.mxu0 0.0
    %652 = vmatpush1.msra.mxu0 0.0
    %653 = vmatprep.subr.mxu0 0.0
    %654 = vmatpush1.msra.mxu0 0.0
    %655 = vmatprep.mubr.f32.mxu0 0.0
    %656 = vmatmul.mubr.f32.gmra.mrb[0].mxu0 %v565
    %v657 = vpop.f32.mrb[0].mxu0
    %v658 = vadd.f32 %v589, %v657
    %v659 = vpop.f32.mrb[0].mxu0
    %660 = vdwg.mxu0
    %vm661 = vcmp.gt.f32.partialorder %v658, 0.0
    %v662 = vmul.f32 %v658, 0.2
    %v663 = vsel %vm661, %v658, %v662
    %v664 = vld [vmem:[#allocation7 + $0x10] sm:$0xff]
    %v665 = vld [vmem:[#allocation7 + $0x38] sm:$0xff]
    %v666 = vld [vmem:[#allocation7 + $0x60] sm:$0xff]
    %v667 = vld [vmem:[#allocation7 + $0x88] sm:$0xff]
    %v668 = vld [vmem:[#allocation7 + $0xb0] sm:$0xff]
    %v669 = vld [vmem:[#allocation7 + $0xd8] sm:$0xff]
    %v670 = vld [vmem:[#allocation7 + $0x100] sm:$0xff]
    %v671 = vld [vmem:[#allocation7 + $0x128] sm:$0xff]
    %v672 = vld [vmem:[#allocation7 + $0x150] sm:$0xff]
    %v673 = vld [vmem:[#allocation7 + $0x178] sm:$0xff]
    %v674 = vld [vmem:[#allocation7 + $0x1a0] sm:$0xff]
    %v675 = vld [vmem:[#allocation7 + $0x1c8] sm:$0xff]
    %v676 = vld [vmem:[#allocation7 + $0x1f0] sm:$0xff]
    %v677 = vld [vmem:[#allocation7 + $0x218] sm:$0xff]
    %v678 = vld [vmem:[#allocation7 + $0x240] sm:$0xff]
    %v679 = vld [vmem:[#allocation7 + $0x268] sm:$0xff]
    %v680 = vld [vmem:[%s5 + $0x2] sm:$0x1]
    %v682 = vlaneseq
    %v683 = vshrl.u32 %v682, 7
    %v684 = vsub.s32 0, %v683
    %v685 = vrot.slane %v680, %v684
    %687 = vmatprep.subr.mxu0 0.0
    %688 = vmatpush1.msra.mxu0 %v664
    %689 = vmatprep.subr.mxu0 0.0
    %690 = vmatpush1.msra.mxu0 %v665
    %691 = vmatprep.subr.mxu0 0.0
    %692 = vmatpush1.msra.mxu0 %v666
    %693 = vmatprep.subr.mxu0 0.0
    %694 = vmatpush1.msra.mxu0 %v667
    %695 = vmatprep.subr.mxu0 0.0
    %696 = vmatpush1.msra.mxu0 %v668
    %697 = vmatprep.subr.mxu0 0.0
    %698 = vmatpush1.msra.mxu0 %v669
    %699 = vmatprep.subr.mxu0 0.0
    %700 = vmatpush1.msra.mxu0 %v670
    %701 = vmatprep.subr.mxu0 0.0
    %702 = vmatpush1.msra.mxu0 %v671
    %703 = vmatprep.subr.mxu0 0.0
    %704 = vmatpush1.msra.mxu0 %v672
    %705 = vmatprep.subr.mxu0 0.0
    %706 = vmatpush1.msra.mxu0 %v673
    %707 = vmatprep.subr.mxu0 0.0
    %708 = vmatpush1.msra.mxu0 %v674
    %709 = vmatprep.subr.mxu0 0.0
    %710 = vmatpush1.msra.mxu0 %v675
    %711 = vmatprep.subr.mxu0 0.0
    %712 = vmatpush1.msra.mxu0 %v676
    %713 = vmatprep.subr.mxu0 0.0
    %714 = vmatpush1.msra.mxu0 %v677
    %715 = vmatprep.subr.mxu0 0.0
    %716 = vmatpush1.msra.mxu0 %v678
    %717 = vmatprep.subr.mxu0 0.0
    %718 = vmatpush1.msra.mxu0 %v679
    %719 = vmatprep.subr.mxu0 0.0
    %720 = vmatpush1.msra.mxu0 0.0
    %721 = vmatprep.subr.mxu0 0.0
    %722 = vmatpush1.msra.mxu0 0.0
    %723 = vmatprep.subr.mxu0 0.0
    %724 = vmatpush1.msra.mxu0 0.0
    %725 = vmatprep.subr.mxu0 0.0
    %726 = vmatpush1.msra.mxu0 0.0
    %727 = vmatprep.subr.mxu0 0.0
    %728 = vmatpush1.msra.mxu0 0.0
    %729 = vmatprep.subr.mxu0 0.0
    %730 = vmatpush1.msra.mxu0 0.0
    %731 = vmatprep.subr.mxu0 0.0
    %732 = vmatpush1.msra.mxu0 0.0
    %733 = vmatprep.subr.mxu0 0.0
    %734 = vmatpush1.msra.mxu0 0.0
    %735 = vmatprep.subr.mxu0 0.0
    %736 = vmatpush1.msra.mxu0 0.0
    %737 = vmatprep.subr.mxu0 0.0
    %738 = vmatpush1.msra.mxu0 0.0
    %739 = vmatprep.subr.mxu0 0.0
    %740 = vmatpush1.msra.mxu0 0.0
    %741 = vmatprep.subr.mxu0 0.0
    %742 = vmatpush1.msra.mxu0 0.0
    %743 = vmatprep.subr.mxu0 0.0
    %744 = vmatpush1.msra.mxu0 0.0
    %745 = vmatprep.subr.mxu0 0.0
    %746 = vmatpush1.msra.mxu0 0.0
    %747 = vmatprep.subr.mxu0 0.0
    %748 = vmatpush1.msra.mxu0 0.0
    %749 = vmatprep.subr.mxu0 0.0
    %750 = vmatpush1.msra.mxu0 0.0
    %751 = vmatprep.mubr.f32.mxu0 0.0
    %752 = vmatmul.mubr.f32.gmra.mrb[0].mxu0 %v663
    %v753 = vpop.f32.mrb[0].mxu0
    %v754 = vadd.f32 %v685, %v753
    %v755 = vpop.f32.mrb[0].mxu0
    %756 = vdwg.mxu0
    %vm757 = vcmp.gt.f32.partialorder %v754, 0.0
    %v758 = vmul.f32 %v754, 0.2
    %v759 = vsel %vm757, %v754, %v758
    %v760 = vld [vmem:[#allocation7 + $0x18] sm:$0xff]
    %v761 = vld [vmem:[#allocation7 + $0x40] sm:$0xff]
    %v762 = vld [vmem:[#allocation7 + $0x68] sm:$0xff]
    %v763 = vld [vmem:[#allocation7 + $0x90] sm:$0xff]
    %v764 = vld [vmem:[#allocation7 + $0xb8] sm:$0xff]
    %v765 = vld [vmem:[#allocation7 + $0xe0] sm:$0xff]
    %v766 = vld [vmem:[#allocation7 + $0x108] sm:$0xff]
    %v767 = vld [vmem:[#allocation7 + $0x130] sm:$0xff]
    %v768 = vld [vmem:[#allocation7 + $0x158] sm:$0xff]
    %v769 = vld [vmem:[#allocation7 + $0x180] sm:$0xff]
    %v770 = vld [vmem:[#allocation7 + $0x1a8] sm:$0xff]
    %v771 = vld [vmem:[#allocation7 + $0x1d0] sm:$0xff]
    %v772 = vld [vmem:[#allocation7 + $0x1f8] sm:$0xff]
    %v773 = vld [vmem:[#allocation7 + $0x220] sm:$0xff]
    %v774 = vld [vmem:[#allocation7 + $0x248] sm:$0xff]
    %v775 = vld [vmem:[#allocation7 + $0x270] sm:$0xff]
    %v776 = vld [vmem:[%s5 + $0x3] sm:$0x1]
    %v778 = vlaneseq
    %v779 = vshrl.u32 %v778, 7
    %v780 = vsub.s32 0, %v779
    %v781 = vrot.slane %v776, %v780
    %783 = vmatprep.subr.mxu0 0.0
    %784 = vmatpush1.msra.mxu0 %v760
    %785 = vmatprep.subr.mxu0 0.0
    %786 = vmatpush1.msra.mxu0 %v761
    %787 = vmatprep.subr.mxu0 0.0
    %788 = vmatpush1.msra.mxu0 %v762
    %789 = vmatprep.subr.mxu0 0.0
    %790 = vmatpush1.msra.mxu0 %v763
    %791 = vmatprep.subr.mxu0 0.0
    %792 = vmatpush1.msra.mxu0 %v764
    %793 = vmatprep.subr.mxu0 0.0
    %794 = vmatpush1.msra.mxu0 %v765
    %795 = vmatprep.subr.mxu0 0.0
    %796 = vmatpush1.msra.mxu0 %v766
    %797 = vmatprep.subr.mxu0 0.0
    %798 = vmatpush1.msra.mxu0 %v767
    %799 = vmatprep.subr.mxu0 0.0
    %800 = vmatpush1.msra.mxu0 %v768
    %801 = vmatprep.subr.mxu0 0.0
    %802 = vmatpush1.msra.mxu0 %v769
    %803 = vmatprep.subr.mxu0 0.0
    %804 = vmatpush1.msra.mxu0 %v770
    %805 = vmatprep.subr.mxu0 0.0
    %806 = vmatpush1.msra.mxu0 %v771
    %807 = vmatprep.subr.mxu0 0.0
    %808 = vmatpush1.msra.mxu0 %v772
    %809 = vmatprep.subr.mxu0 0.0
    %810 = vmatpush1.msra.mxu0 %v773
    %811 = vmatprep.subr.mxu0 0.0
    %812 = vmatpush1.msra.mxu0 %v774
    %813 = vmatprep.subr.mxu0 0.0
    %814 = vmatpush1.msra.mxu0 %v775
    %815 = vmatprep.subr.mxu0 0.0
    %816 = vmatpush1.msra.mxu0 0.0
    %817 = vmatprep.subr.mxu0 0.0
    %818 = vmatpush1.msra.mxu0 0.0
    %819 = vmatprep.subr.mxu0 0.0
    %820 = vmatpush1.msra.mxu0 0.0
    %821 = vmatprep.subr.mxu0 0.0
    %822 = vmatpush1.msra.mxu0 0.0
    %823 = vmatprep.subr.mxu0 0.0
    %824 = vmatpush1.msra.mxu0 0.0
    %825 = vmatprep.subr.mxu0 0.0
    %826 = vmatpush1.msra.mxu0 0.0
    %827 = vmatprep.subr.mxu0 0.0
    %828 = vmatpush1.msra.mxu0 0.0
    %829 = vmatprep.subr.mxu0 0.0
    %830 = vmatpush1.msra.mxu0 0.0
    %831 = vmatprep.subr.mxu0 0.0
    %832 = vmatpush1.msra.mxu0 0.0
    %833 = vmatprep.subr.mxu0 0.0
    %834 = vmatpush1.msra.mxu0 0.0
    %835 = vmatprep.subr.mxu0 0.0
    %836 = vmatpush1.msra.mxu0 0.0
    %837 = vmatprep.subr.mxu0 0.0
    %838 = vmatpush1.msra.mxu0 0.0
    %839 = vmatprep.subr.mxu0 0.0
    %840 = vmatpush1.msra.mxu0 0.0
    %841 = vmatprep.subr.mxu0 0.0
    %842 = vmatpush1.msra.mxu0 0.0
    %843 = vmatprep.subr.mxu0 0.0
    %844 = vmatpush1.msra.mxu0 0.0
    %845 = vmatprep.subr.mxu0 0.0
    %846 = vmatpush1.msra.mxu0 0.0
    %847 = vmatprep.mubr.f32.mxu0 0.0
    %848 = vmatmul.mubr.f32.gmra.mrb[0].mxu0 %v759
    %v849 = vpop.f32.mrb[0].mxu0
    %v850 = vadd.f32 %v781, %v849
    %v851 = vpop.f32.mrb[0].mxu0
    %852 = vdwg.mxu0
    %vm853 = vcmp.gt.f32.partialorder %v850, 0.0
    %v854 = vmul.f32 %v850, 0.2
    %v855 = vsel %vm853, %v850, %v854
    %v856 = vld [vmem:[#allocation7 + $0x20] sm:$0xff]
    %v857 = vld [vmem:[#allocation7 + $0x48] sm:$0xff]
    %v858 = vld [vmem:[#allocation7 + $0x70] sm:$0xff]
    %v859 = vld [vmem:[#allocation7 + $0x98] sm:$0xff]
    %v860 = vld [vmem:[#allocation7 + $0xc0] sm:$0xff]
    %v861 = vld [vmem:[#allocation7 + $0xe8] sm:$0xff]
    %v862 = vld [vmem:[#allocation7 + $0x110] sm:$0xff]
    %v863 = vld [vmem:[#allocation7 + $0x138] sm:$0xff]
    %v864 = vld [vmem:[#allocation7 + $0x160] sm:$0xff]
    %v865 = vld [vmem:[#allocation7 + $0x188] sm:$0xff]
    %v866 = vld [vmem:[#allocation7 + $0x1b0] sm:$0xff]
    %v867 = vld [vmem:[#allocation7 + $0x1d8] sm:$0xff]
    %v868 = vld [vmem:[#allocation7 + $0x200] sm:$0xff]
    %v869 = vld [vmem:[#allocation7 + $0x228] sm:$0xff]
    %v870 = vld [vmem:[#allocation7 + $0x250] sm:$0xff]
    %v871 = vld [vmem:[#allocation7 + $0x278] sm:$0xff]
    %v872 = vld [vmem:[%s5 + $0x4] sm:$0x1]
    %v874 = vlaneseq
    %v875 = vshrl.u32 %v874, 7
    %v876 = vsub.s32 0, %v875
    %v877 = vrot.slane %v872, %v876
    %879 = vmatprep.subr.mxu0 0.0
    %880 = vmatpush1.msra.mxu0 %v856
    %881 = vmatprep.subr.mxu0 0.0
    %882 = vmatpush1.msra.mxu0 %v857
    %883 = vmatprep.subr.mxu0 0.0
    %884 = vmatpush1.msra.mxu0 %v858
    %885 = vmatprep.subr.mxu0 0.0
    %886 = vmatpush1.msra.mxu0 %v859
    %887 = vmatprep.subr.mxu0 0.0
    %888 = vmatpush1.msra.mxu0 %v860
    %889 = vmatprep.subr.mxu0 0.0
    %890 = vmatpush1.msra.mxu0 %v861
    %891 = vmatprep.subr.mxu0 0.0
    %892 = vmatpush1.msra.mxu0 %v862
    %893 = vmatprep.subr.mxu0 0.0
    %894 = vmatpush1.msra.mxu0 %v863
    %895 = vmatprep.subr.mxu0 0.0
    %896 = vmatpush1.msra.mxu0 %v864
    %897 = vmatprep.subr.mxu0 0.0
    %898 = vmatpush1.msra.mxu0 %v865
    %899 = vmatprep.subr.mxu0 0.0
    %900 = vmatpush1.msra.mxu0 %v866
    %901 = vmatprep.subr.mxu0 0.0
    %902 = vmatpush1.msra.mxu0 %v867
    %903 = vmatprep.subr.mxu0 0.0
    %904 = vmatpush1.msra.mxu0 %v868
    %905 = vmatprep.subr.mxu0 0.0
    %906 = vmatpush1.msra.mxu0 %v869
    %907 = vmatprep.subr.mxu0 0.0
    %908 = vmatpush1.msra.mxu0 %v870
    %909 = vmatprep.subr.mxu0 0.0
    %910 = vmatpush1.msra.mxu0 %v871
    %911 = vmatprep.subr.mxu0 0.0
    %912 = vmatpush1.msra.mxu0 0.0
    %913 = vmatprep.subr.mxu0 0.0
    %914 = vmatpush1.msra.mxu0 0.0
    %915 = vmatprep.subr.mxu0 0.0
    %916 = vmatpush1.msra.mxu0 0.0
    %917 = vmatprep.subr.mxu0 0.0
    %918 = vmatpush1.msra.mxu0 0.0
    %919 = vmatprep.subr.mxu0 0.0
    %920 = vmatpush1.msra.mxu0 0.0
    %921 = vmatprep.subr.mxu0 0.0
    %922 = vmatpush1.msra.mxu0 0.0
    %923 = vmatprep.subr.mxu0 0.0
    %924 = vmatpush1.msra.mxu0 0.0
    %925 = vmatprep.subr.mxu0 0.0
    %926 = vmatpush1.msra.mxu0 0.0
    %927 = vmatprep.subr.mxu0 0.0
    %928 = vmatpush1.msra.mxu0 0.0
    %929 = vmatprep.subr.mxu0 0.0
    %930 = vmatpush1.msra.mxu0 0.0
    %931 = vmatprep.subr.mxu0 0.0
    %932 = vmatpush1.msra.mxu0 0.0
    %933 = vmatprep.subr.mxu0 0.0
    %934 = vmatpush1.msra.mxu0 0.0
    %935 = vmatprep.subr.mxu0 0.0
    %936 = vmatpush1.msra.mxu0 0.0
    %937 = vmatprep.subr.mxu0 0.0
    %938 = vmatpush1.msra.mxu0 0.0
    %939 = vmatprep.subr.mxu0 0.0
    %940 = vmatpush1.msra.mxu0 0.0
    %941 = vmatprep.subr.mxu0 0.0
    %942 = vmatpush1.msra.mxu0 0.0
    %943 = vmatprep.mubr.f32.mxu0 0.0
    %944 = vmatmul.mubr.f32.gmra.mrb[0].mxu0 %v855
    %v945 = vpop.f32.mrb[0].mxu0
    %v946 = vadd.f32 %v877, %v945
    %v947 = vpop.f32.mrb[0].mxu0
    %948 = vdwg.mxu0
    %v949 = vtanh.pop %v946
    %950 = vst [vmem:[#allocation8] sm:$0x3] %v949
    // Predicated region
    $region38: #{tpu_custom_call.1} parent=1 // pred_check
      _
    $region39: #{tpu_custom_call.1} parent=1 // pred_check_branch
      %952 = sbr.rel (0) target = $region41
    $region40: #{tpu_custom_call.1} parent=1 // pred_region
      %s954 = ssub.s32 32, 32
      %955 = vsyncadd [#allocation4], %s954
      %s957 = sshll.u32 [#allocation8], 4
      %s958 = int_to_ptr.vmem [resolvable:$true] %s957
      %960 = dma.vmem_to_hbm [thread:$0]  %s958, 32, %s6, [#allocation4]
    $region41: #{tpu_custom_call.1} parent=1 // pred_fallthru
      _
    // Predicated region
    $region42: #{tpu_custom_call.1} parent=1 // pred_check
      _
    $region43: #{tpu_custom_call.1} parent=1 // pred_check_branch
      %962 = sbr.rel (0) target = $region45
    $region44: #{tpu_custom_call.1} parent=1 // pred_region
      %963 = dma.done [#allocation4], 32
    $region45: #{tpu_custom_call.1} parent=1 // pred_fallthru
      _
    %964 = vsyncpa [#allocation3], 1
    %965 = vsyncpa [#allocation6], 1
    %966 = vsyncpa [#allocation4], 1

</llo_original>
